<compile_context>
chip_gen: v6e
topology: v6e:2x2x1
jax: 0.10.0
libtpu: 0.0.40
codegen_flags: <defaults>
</compile_context>

<pallas_src>
import jax
import jax.numpy as jnp
from jax.experimental import pallas as pl
from jax.experimental.pallas import tpu as pltpu

N_INPUT = 16     # X.shape[1] in the reference script (kept small & consistent)
N_HIDDEN1 = 40
N_HIDDEN2 = 40
N_OUTPUT = 1
BATCH = 8

H_PAD = 48           # hidden width 40 padded to a multiple of 8 (sublane axis)
MAX_TILE_B = 2048    # batch (lane) tile upper bound; VMEM use stays tiny


def _round_up(x, m):
    return (x + m - 1) // m * m


def _choose_tiling(batch):
    """Batch tiling: lanes padded to 128, >=2 grid steps (v7x megacore),
    tile capped at MAX_TILE_B, padding waste bounded by ~128 rows/step."""
    b128 = _round_up(max(batch, 1), 128)
    num_steps = max(2, pl.cdiv(b128, MAX_TILE_B))
    tile = _round_up(pl.cdiv(b128, num_steps), 128)
    return tile, tile * num_steps, num_steps


def funky_kernel(x_ref, w1_ref, b1_ref, w2_ref, b2_ref, w3_ref, b3_ref, o_ref):
    x_t = x_ref[...]                                          # (N_INPUT, TILE_B) f32

    # hidden1 (MXU, f32 acc); X3 = relu(h) + tanh(h)  (VPU + EUP, 48 sublanes only)
    h = jnp.dot(w1_ref[...], x_t, preferred_element_type=jnp.float32) + b1_ref[...]
    x3 = jnp.maximum(h, 0.0) + jnp.tanh(h)                    # (H_PAD, TILE_B)

    # hidden2 + relu (MXU + VPU), 48x48 padded weights
    h2 = jnp.dot(w2_ref[...], x3, preferred_element_type=jnp.float32) + b2_ref[...]
    h2 = jnp.maximum(h2, 0.0)                                 # (H_PAD, TILE_B)

    # output layer: 1-row contraction on the MXU -> already lane-dense (1, TILE_B)
    logits = jnp.dot(w3_ref[...], h2, preferred_element_type=jnp.float32) + b3_ref[0, 0]
    o_ref[...] = jax.nn.sigmoid(logits)                       # (1, TILE_B) lane-dense store


def funky_network(x, params):
    """x: [batch, N_INPUT] float32. params: PyTorch-convention weights.

    Returns [batch, 1] float32, matching FunkyNetwork.forward.
    """
    batch, n_in = x.shape
    n_h1 = params["w1"].shape[0]
    n_h2 = params["w2"].shape[0]

    # ---- one-time weight prep: features-on-sublanes layout, hidden padded 40 -> 48.
    # Padding is exact: padded weight rows/cols and biases are zero; relu(0)=tanh(0)=0.
    w1p = jnp.zeros((H_PAD, n_in), jnp.float32).at[:n_h1, :].set(params["w1"])
    b1p = jnp.zeros((H_PAD, 1), jnp.float32).at[:n_h1, 0].set(params["b1"])
    w2p = jnp.zeros((H_PAD, H_PAD), jnp.float32).at[:n_h2, :n_h1].set(params["w2"])
    b2p = jnp.zeros((H_PAD, 1), jnp.float32).at[:n_h2, 0].set(params["b2"])
    w3p = jnp.zeros((1, H_PAD), jnp.float32).at[0, :n_h2].set(params["w3"][0])
    b3 = params["b3"].reshape(1, 1).astype(jnp.float32)        # scalar -> SMEM

    # ---- batch tiling + pre-transpose: x_t is (N_INPUT, B_pad), batch on lanes.
    tile, b_pad, num_steps = _choose_tiling(batch)
    xp = x.astype(jnp.float32).T                               # (n_in, batch)
    if b_pad != batch:
        xp = jnp.pad(xp, ((0, 0), (0, b_pad - batch)))

    cost = pl.CostEstimate(
        flops=2 * b_pad * (n_in * n_h1 + n_h1 * n_h2 + n_h2),
        transcendentals=b_pad * (n_h1 + 1),                    # tanh + sigmoid
        bytes_accessed=4 * (b_pad * (n_in + 1)
                            + w1p.size + b1p.size + w2p.size + b2p.size + w3p.size + 1),
    )

    out = pl.pallas_call(
        funky_kernel,
        out_shape=jax.ShapeDtypeStruct((1, b_pad), jnp.float32),
        grid=(num_steps,),
        in_specs=[
            pl.BlockSpec((n_in, tile), lambda i: (0, i)),        # x_t (pipelined per tile)
            pl.BlockSpec((H_PAD, n_in), lambda i: (0, 0)),       # w1  (VMEM-resident)
            pl.BlockSpec((H_PAD, 1), lambda i: (0, 0)),          # b1
            pl.BlockSpec((H_PAD, H_PAD), lambda i: (0, 0)),      # w2
            pl.BlockSpec((H_PAD, 1), lambda i: (0, 0)),          # b2
            pl.BlockSpec((1, H_PAD), lambda i: (0, 0)),          # w3 row
            pl.BlockSpec(memory_space=pltpu.MemorySpace.SMEM),   # b3 scalar
        ],
        # batch on the lane axis -> unmasked, lane-dense stores.
        out_specs=pl.BlockSpec((1, tile), lambda i: (0, i)),
        compiler_params=pltpu.CompilerParams(
            dimension_semantics=("parallel",),   # shard batch tiles across v7x's 2 TCs
        ),
        cost_estimate=cost,
    )(xp, w1p, b1p, w2p, b2p, w3p, b3)

    return out[0, :batch].reshape(batch, N_OUTPUT)


def init_params(key):
    """Deterministic init mimicking nn.Linear default: U(-1/sqrt(fan_in), +1/sqrt(fan_in))."""
    ks = jax.random.split(key, 6)

    def lin(kw, kb, fan_in, fan_out):
        bound = 1.0 / jnp.sqrt(fan_in)
        w = jax.random.uniform(kw, (fan_out, fan_in), jnp.float32, -bound, bound)
        b = jax.random.uniform(kb, (fan_out,), jnp.float32, -bound, bound)
        return w, b

    w1, b1 = lin(ks[0], ks[1], N_INPUT, N_HIDDEN1)
    w2, b2 = lin(ks[2], ks[3], N_HIDDEN1, N_HIDDEN2)
    w3, b3 = lin(ks[4], ks[5], N_HIDDEN2, N_OUTPUT)
    return {"w1": w1, "b1": b1, "w2": w2, "b2": b2, "w3": w3, "b3": b3}


def reference_forward(x, p):
    h = x @ p["w1"].T + p["b1"]
    x3 = jnp.maximum(h, 0.0) + jnp.tanh(h)
    h2 = jnp.maximum(x3 @ p["w2"].T + p["b2"], 0.0)
    return jax.nn.sigmoid(h2 @ p["w3"].T + p["b3"])


if __name__ == "__main__":
    key = jax.random.PRNGKey(0)
    kx, kp = jax.random.split(key)

    x = jax.random.uniform(kx, (BATCH, N_INPUT), jnp.float32)
    x = x / jnp.max(x)  # X = X / X.max() preprocessing from the reference script

    params = init_params(kp)

    out = funky_network(x, params)
    out = jax.block_until_ready(out)

    ref = reference_forward(x, params)
    assert out.shape == (BATCH, N_OUTPUT)
    assert jnp.allclose(out, ref, atol=1e-5, rtol=1e-5), "mismatch vs pure-JAX reference"

    print("KERNEL_OK")
</pallas_src>

<mosaic_0001>
module attributes {stable_mosaic.version = 11 : i64} {
  func.func @funky_kernel(%arg0: i32, %arg1: memref<16x128xf32, #tpu.memory_space<vmem>>, %arg2: memref<48x16xf32, #tpu.memory_space<vmem>>, %arg3: memref<48x1xf32, #tpu.memory_space<vmem>>, %arg4: memref<48x48xf32, #tpu.memory_space<vmem>>, %arg5: memref<48x1xf32, #tpu.memory_space<vmem>>, %arg6: memref<1x48xf32, #tpu.memory_space<vmem>>, %arg7: memref<1x1xf32, #tpu.memory_space<smem>>, %arg8: memref<1x128xf32, #tpu.memory_space<vmem>>) attributes {dimension_semantics = [#tpu.dimension_semantics<parallel>], iteration_bounds = array<i64: 2>, scalar_prefetch = 0 : i64, scratch_operands = 0 : i64, tpu.core_type = #tpu.core_type<tc>, window_params = [{transform_indices = @transform_0, window_bounds = array<i64: 16, 128>}, {pipeline_mode = #tpu.pipeline_mode<synchronous>, transform_indices = @transform_1, window_bounds = array<i64: 48, 16>}, {pipeline_mode = #tpu.pipeline_mode<synchronous>, transform_indices = @transform_2, window_bounds = array<i64: 48, 1>}, {pipeline_mode = #tpu.pipeline_mode<synchronous>, transform_indices = @transform_3, window_bounds = array<i64: 48, 48>}, {pipeline_mode = #tpu.pipeline_mode<synchronous>, transform_indices = @transform_4, window_bounds = array<i64: 48, 1>}, {pipeline_mode = #tpu.pipeline_mode<synchronous>, transform_indices = @transform_5, window_bounds = array<i64: 1, 48>}, {transform_indices = @transform_6, window_bounds = array<i64: 1, 1>}, {transform_indices = @transform_7, window_bounds = array<i64: 1, 128>}]} {
    %c0 = arith.constant 0 : index
    %c0_0 = arith.constant 0 : index
    %0 = vector.load %arg1[%c0, %c0_0] : memref<16x128xf32, #tpu.memory_space<vmem>>, vector<16x128xf32>
    %c0_1 = arith.constant 0 : index
    %c0_2 = arith.constant 0 : index
    %1 = vector.load %arg2[%c0_1, %c0_2] : memref<48x16xf32, #tpu.memory_space<vmem>>, vector<48x16xf32>
    %cst = arith.constant dense<0.000000e+00> : vector<48x128xf32>
    %2 = tpu.matmul %1, %0, %cst {dimension_numbers = #tpu.dot_dimension_numbers<[1], [0], [0], [1], [0, 0, 1, 1], [], []>} : vector<48x16xf32>, vector<16x128xf32>, vector<48x128xf32> -> vector<48x128xf32>
    %c0_3 = arith.constant 0 : index
    %c0_4 = arith.constant 0 : index
    %3 = vector.load %arg3[%c0_3, %c0_4] : memref<48x1xf32, #tpu.memory_space<vmem>>, vector<48x1xf32>
    %4 = vector.broadcast %3 : vector<48x1xf32> to vector<48x128xf32>
    %5 = arith.addf %2, %4 : vector<48x128xf32>
    %cst_5 = arith.constant 0.000000e+00 : f32
    %6 = vector.broadcast %cst_5 : f32 to vector<48x128xf32>
    %7 = arith.maximumf %5, %6 : vector<48x128xf32>
    %8 = math.tanh %5 : vector<48x128xf32>
    %9 = arith.addf %7, %8 : vector<48x128xf32>
    %c0_6 = arith.constant 0 : index
    %c0_7 = arith.constant 0 : index
    %10 = vector.load %arg4[%c0_6, %c0_7] : memref<48x48xf32, #tpu.memory_space<vmem>>, vector<48x48xf32>
    %cst_8 = arith.constant dense<0.000000e+00> : vector<48x128xf32>
    %11 = tpu.matmul %10, %9, %cst_8 {dimension_numbers = #tpu.dot_dimension_numbers<[1], [0], [0], [1], [0, 0, 1, 1], [], []>} : vector<48x48xf32>, vector<48x128xf32>, vector<48x128xf32> -> vector<48x128xf32>
    %c0_9 = arith.constant 0 : index
    %c0_10 = arith.constant 0 : index
    %12 = vector.load %arg5[%c0_9, %c0_10] : memref<48x1xf32, #tpu.memory_space<vmem>>, vector<48x1xf32>
    %13 = vector.broadcast %12 : vector<48x1xf32> to vector<48x128xf32>
    %14 = arith.addf %11, %13 : vector<48x128xf32>
    %cst_11 = arith.constant 0.000000e+00 : f32
    %15 = vector.broadcast %cst_11 : f32 to vector<48x128xf32>
    %16 = arith.maximumf %14, %15 : vector<48x128xf32>
    %c0_12 = arith.constant 0 : index
    %c0_13 = arith.constant 0 : index
    %17 = vector.load %arg6[%c0_12, %c0_13] : memref<1x48xf32, #tpu.memory_space<vmem>>, vector<1x48xf32>
    %cst_14 = arith.constant dense<0.000000e+00> : vector<1x128xf32>
    %18 = tpu.matmul %17, %16, %cst_14 {dimension_numbers = #tpu.dot_dimension_numbers<[1], [0], [0], [1], [0, 0, 1, 1], [], []>} : vector<1x48xf32>, vector<48x128xf32>, vector<1x128xf32> -> vector<1x128xf32>
    %c0_15 = arith.constant 0 : index
    %c0_16 = arith.constant 0 : index
    %19 = memref.load %arg7[%c0_15, %c0_16] : memref<1x1xf32, #tpu.memory_space<smem>>
    %20 = vector.broadcast %19 : f32 to vector<1x128xf32>
    %21 = arith.addf %18, %20 : vector<1x128xf32>
    %22 = arith.negf %21 : vector<1x128xf32>
    %23 = math.exp %22 : vector<1x128xf32>
    %cst_17 = arith.constant 1.000000e+00 : f32
    %24 = vector.broadcast %cst_17 : f32 to vector<1x128xf32>
    %25 = arith.addf %24, %23 : vector<1x128xf32>
    %26 = arith.divf %24, %25 : vector<1x128xf32>
    %c0_18 = arith.constant 0 : index
    %c0_19 = arith.constant 0 : index
    %27 = vector.load %arg8[%c0_18, %c0_19] : memref<1x128xf32, #tpu.memory_space<vmem>>, vector<1x128xf32>
    tpu.vector_store %arg8[%c0_18, %c0_19], %26 {strides = array<i32>} : memref<1x128xf32, #tpu.memory_space<vmem>>, vector<1x128xf32>,
    return
  }
  func.func @transform_0(%arg0: i32) -> (i32, i32) {
    %c0_i32 = arith.constant 0 : i32
    %c0_i32_0 = arith.constant 0 : i32
    return %c0_i32, %arg0 : i32, i32
  }
  func.func @transform_1(%arg0: i32) -> (i32, i32) {
    %c0_i32 = arith.constant 0 : i32
    %c0_i32_0 = arith.constant 0 : i32
    %c0_i32_1 = arith.constant 0 : i32
    return %c0_i32, %c0_i32_0 : i32, i32
  }
  func.func @transform_2(%arg0: i32) -> (i32, i32) {
    %c0_i32 = arith.constant 0 : i32
    %c0_i32_0 = arith.constant 0 : i32
    %c0_i32_1 = arith.constant 0 : i32
    return %c0_i32, %c0_i32_0 : i32, i32
  }
  func.func @transform_3(%arg0: i32) -> (i32, i32) {
    %c0_i32 = arith.constant 0 : i32
    %c0_i32_0 = arith.constant 0 : i32
    %c0_i32_1 = arith.constant 0 : i32
    return %c0_i32, %c0_i32_0 : i32, i32
  }
  func.func @transform_4(%arg0: i32) -> (i32, i32) {
    %c0_i32 = arith.constant 0 : i32
    %c0_i32_0 = arith.constant 0 : i32
    %c0_i32_1 = arith.constant 0 : i32
    return %c0_i32, %c0_i32_0 : i32, i32
  }
  func.func @transform_5(%arg0: i32) -> (i32, i32) {
    %c0_i32 = arith.constant 0 : i32
    %c0_i32_0 = arith.constant 0 : i32
    %c0_i32_1 = arith.constant 0 : i32
    return %c0_i32, %c0_i32_0 : i32, i32
  }
  func.func @transform_6(%arg0: i32) -> (i32, i32) {
    %c0_i32 = arith.constant 0 : i32
    %c0_i32_0 = arith.constant 0 : i32
    %c0_i32_1 = arith.constant 0 : i32
    return %c0_i32, %c0_i32_0 : i32, i32
  }
  func.func @transform_7(%arg0: i32) -> (i32, i32) {
    %c0_i32 = arith.constant 0 : i32
    %c0_i32_0 = arith.constant 0 : i32
    return %c0_i32, %arg0 : i32, i32
  }
}

</mosaic_0001>

<llo_original>
// kernel: tpu_custom_call.1
$region0: #{tpu_custom_call.1}
  #allocation0 [shape = 'u32[]', space=smem, size = 0x4, offset = 0x4, fixed_abs, tag = 'smem constant byte address 0x4 - core index']
  #allocation1 [shape = 'u32[144,128]{1,0:T(1,128)}', space=vmem, size = 0x12000, scoped, tag = 'internal scratch']
  #allocation2 [shape = 'f32[1,1]{1,0:T(1,128)S(6)}', space=smem, size = 0x200, scoped, tag = 'scoped memory for tpu_custom_call.1']
  %s0 = inlined_call_operand.vmem [shape: f32[16,256], index: 0, kind: input, shape index: {}]
  %s1 = inlined_call_operand.vmem [shape: f32[48,16], index: 1, kind: input, shape index: {}]
  %s2 = inlined_call_operand.vmem [shape: f32[48,1], index: 2, kind: input, shape index: {}]
  %s3 = inlined_call_operand.vmem [shape: f32[48,48], index: 3, kind: input, shape index: {}]
  %s4 = inlined_call_operand.vmem [shape: f32[48,1], index: 4, kind: input, shape index: {}]
  %s5 = inlined_call_operand.vmem [shape: f32[1,48], index: 5, kind: input, shape index: {}]
  %s6 = inlined_call_operand.<no memory space> [shape: f32[1,1], index: 6, kind: input, shape index: {}]
  %s7 = inlined_call_operand.hbm [shape: f32[1,256], index: 7, kind: output, shape index: {}]
  %s8 = sld [smem:[#allocation0]]
  $region99: #{tpu_custom_call.1} parent=0
    _
  %s10 = ssub.s32 1, %s8
  %s11 = scalar_select 0, %s10, %s8
  %12 = sst [smem:[#allocation2]] %s6
  $region1: #{tpu_custom_call.1} parent=0
    #allocation3 [shape = 'u8[16384]{0}', space=vmem, size = 0x4000, scoped, tag = 'input window, operand 0']
    #allocation4 [shape = 'u8[1024]{0}', space=vmem, size = 0x400, scoped, tag = 'output window, operand 0']
    #allocation5 [shape = 's32[2]{0}', space=sflag, size = 0x8, scoped, tag = 'scoped memory for tpu_custom_call.1']
    %13 = vsyncpa [#allocation5], 0
    %s14 = scalar_lea.sflag [#allocation5], 1
    %15 = vsyncpa %s14, 0
    loop: start=0, step=1, limit=4
    $region2: #{tpu_custom_call.1} parent=1 // loop_pre_header
      _
    $region3: #{tpu_custom_call.1} parent=1 // loop_header
      %s17 = sphi 0, %s21
      %p18 = scmp.ge.s32.totalorder %s17, 4
      %s27 = sphi 0, %s29
      %s30 = sphi 0, %s27
      %s31 = sphi 0, %s30
      %s47 = sphi 0, %s31
      %s51 = sphi 0, %s51
      %s53 = sphi 0, %s51
      %s54 = sphi 0, %s53
      %s68 = sphi 0, %s54
      %s72 = sphi 0, %s72
      %s74 = sphi 0, %s72
      %s75 = sphi 0, %s74
      %s89 = sphi 0, %s75
      %s93 = sphi 0, %s93
      %s95 = sphi 0, %s93
      %s96 = sphi 0, %s95
      %s110 = sphi 0, %s96
      %s114 = sphi 0, %s114
      %s116 = sphi 0, %s114
      %s117 = sphi 0, %s116
      %s131 = sphi 0, %s117
      %s135 = sphi 0, %s135
      %s137 = sphi 0, %s135
      %s138 = sphi 0, %s137
      %s152 = sphi 0, %s138
      %s156 = sphi 0, %s156
      %s158 = sphi 0, %s156
      %s159 = sphi 0, %s158
      %s173 = sphi 0, %s159
      %s179 = sphi 0, %s181
      %s182 = sphi 0, %s179
      %s183 = sphi 0, %s182
      %s199 = sphi 0, %s183
    $region4: #{tpu_custom_call.1} parent=1 // loop_header_branch
      %20 = sbr.rel (%p18) target = $region8
    $region5: #{tpu_custom_call.1} parent=1 // loop_body
      %s22 = ssub.s32 %s17, 1
      %s23 = ssub.s32 %s17, 2
      %s24 = sadd.s32 %s17, 1
      %s25 = ssub.s32 %s17, %s24
      %p26 = scmp.eq.s32.totalorder %s25, 0
      %s28 = sadd.s32 %s27, 1
      %s29 = scalar_select %p26, %s27, %s28
      %p32 = pneg %p26
      %p33 = scmp.eq.s32.totalorder %s17, 1
      %p34 = por %p32, %p33
      %p35 = scmp.ne.s32.totalorder %s27, %s30
      %p36 = scmp.eq.s32.totalorder %s17, 0
      %p37 = por %p35, %p36
      %p38 = scmp.ne.s32.totalorder %s27, %s30
      %p39 = scmp.eq.s32.totalorder %s22, 1
      %p40 = por %p38, %p39
      %p41 = scmp.ne.s32.totalorder %s30, %s31
      %p42 = scmp.eq.s32.totalorder %s22, 0
      %p43 = por %p41, %p42
      %p44 = scmp.ne.s32.totalorder %s30, %s31
      %p45 = scmp.eq.s32.totalorder %s23, 1
      %p46 = por %p44, %p45
      %p48 = scmp.ne.s32.totalorder %s31, %s47
      %p49 = scmp.eq.s32.totalorder %s23, 0
      %p50 = por %p48, %p49
      %s52 = sadd.s32 %s51, 1
      %p55 = scmp.eq.s32.totalorder %s17, 1
      %p56 = scmp.ne.s32.totalorder %s51, %s53
      %p57 = scmp.eq.s32.totalorder %s17, 0
      %p58 = por %p56, %p57
      %p59 = scmp.ne.s32.totalorder %s51, %s53
      %p60 = scmp.eq.s32.totalorder %s22, 1
      %p61 = por %p59, %p60
      %p62 = scmp.ne.s32.totalorder %s53, %s54
      %p63 = scmp.eq.s32.totalorder %s22, 0
      %p64 = por %p62, %p63
      %p65 = scmp.ne.s32.totalorder %s53, %s54
      %p66 = scmp.eq.s32.totalorder %s23, 1
      %p67 = por %p65, %p66
      %p69 = scmp.ne.s32.totalorder %s54, %s68
      %p70 = scmp.eq.s32.totalorder %s23, 0
      %p71 = por %p69, %p70
      %s73 = sadd.s32 %s72, 1
      %p76 = scmp.eq.s32.totalorder %s17, 1
      %p77 = scmp.ne.s32.totalorder %s72, %s74
      %p78 = scmp.eq.s32.totalorder %s17, 0
      %p79 = por %p77, %p78
      %p80 = scmp.ne.s32.totalorder %s72, %s74
      %p81 = scmp.eq.s32.totalorder %s22, 1
      %p82 = por %p80, %p81
      %p83 = scmp.ne.s32.totalorder %s74, %s75
      %p84 = scmp.eq.s32.totalorder %s22, 0
      %p85 = por %p83, %p84
      %p86 = scmp.ne.s32.totalorder %s74, %s75
      %p87 = scmp.eq.s32.totalorder %s23, 1
      %p88 = por %p86, %p87
      %p90 = scmp.ne.s32.totalorder %s75, %s89
      %p91 = scmp.eq.s32.totalorder %s23, 0
      %p92 = por %p90, %p91
      %s94 = sadd.s32 %s93, 1
      %p97 = scmp.eq.s32.totalorder %s17, 1
      %p98 = scmp.ne.s32.totalorder %s93, %s95
      %p99 = scmp.eq.s32.totalorder %s17, 0
      %p100 = por %p98, %p99
      %p101 = scmp.ne.s32.totalorder %s93, %s95
      %p102 = scmp.eq.s32.totalorder %s22, 1
      %p103 = por %p101, %p102
      %p104 = scmp.ne.s32.totalorder %s95, %s96
      %p105 = scmp.eq.s32.totalorder %s22, 0
      %p106 = por %p104, %p105
      %p107 = scmp.ne.s32.totalorder %s95, %s96
      %p108 = scmp.eq.s32.totalorder %s23, 1
      %p109 = por %p107, %p108
      %p111 = scmp.ne.s32.totalorder %s96, %s110
      %p112 = scmp.eq.s32.totalorder %s23, 0
      %p113 = por %p111, %p112
      %s115 = sadd.s32 %s114, 1
      %p118 = scmp.eq.s32.totalorder %s17, 1
      %p119 = scmp.ne.s32.totalorder %s114, %s116
      %p120 = scmp.eq.s32.totalorder %s17, 0
      %p121 = por %p119, %p120
      %p122 = scmp.ne.s32.totalorder %s114, %s116
      %p123 = scmp.eq.s32.totalorder %s22, 1
      %p124 = por %p122, %p123
      %p125 = scmp.ne.s32.totalorder %s116, %s117
      %p126 = scmp.eq.s32.totalorder %s22, 0
      %p127 = por %p125, %p126
      %p128 = scmp.ne.s32.totalorder %s116, %s117
      %p129 = scmp.eq.s32.totalorder %s23, 1
      %p130 = por %p128, %p129
      %p132 = scmp.ne.s32.totalorder %s117, %s131
      %p133 = scmp.eq.s32.totalorder %s23, 0
      %p134 = por %p132, %p133
      %s136 = sadd.s32 %s135, 1
      %p139 = scmp.eq.s32.totalorder %s17, 1
      %p140 = scmp.ne.s32.totalorder %s135, %s137
      %p141 = scmp.eq.s32.totalorder %s17, 0
      %p142 = por %p140, %p141
      %p143 = scmp.ne.s32.totalorder %s135, %s137
      %p144 = scmp.eq.s32.totalorder %s22, 1
      %p145 = por %p143, %p144
      %p146 = scmp.ne.s32.totalorder %s137, %s138
      %p147 = scmp.eq.s32.totalorder %s22, 0
      %p148 = por %p146, %p147
      %p149 = scmp.ne.s32.totalorder %s137, %s138
      %p150 = scmp.eq.s32.totalorder %s23, 1
      %p151 = por %p149, %p150
      %p153 = scmp.ne.s32.totalorder %s138, %s152
      %p154 = scmp.eq.s32.totalorder %s23, 0
      %p155 = por %p153, %p154
      %s157 = sadd.s32 %s156, 1
      %p160 = scmp.eq.s32.totalorder %s17, 1
      %p161 = scmp.ne.s32.totalorder %s156, %s158
      %p162 = scmp.eq.s32.totalorder %s17, 0
      %p163 = por %p161, %p162
      %p164 = scmp.ne.s32.totalorder %s156, %s158
      %p165 = scmp.eq.s32.totalorder %s22, 1
      %p166 = por %p164, %p165
      %p167 = scmp.ne.s32.totalorder %s158, %s159
      %p168 = scmp.eq.s32.totalorder %s22, 0
      %p169 = por %p167, %p168
      %p170 = scmp.ne.s32.totalorder %s158, %s159
      %p171 = scmp.eq.s32.totalorder %s23, 1
      %p172 = por %p170, %p171
      %p174 = scmp.ne.s32.totalorder %s159, %s173
      %p175 = scmp.eq.s32.totalorder %s23, 0
      %p176 = por %p174, %p175
      %s177 = ssub.s32 %s17, %s24
      %p178 = scmp.eq.s32.totalorder %s177, 0
      %s180 = sadd.s32 %s179, 1
      %s181 = scalar_select %p178, %s179, %s180
      %p184 = pneg %p178
      %p185 = scmp.eq.s32.totalorder %s17, 1
      %p186 = por %p184, %p185
      %p187 = scmp.ne.s32.totalorder %s179, %s182
      %p188 = scmp.eq.s32.totalorder %s17, 0
      %p189 = por %p187, %p188
      %p190 = scmp.ne.s32.totalorder %s179, %s182
      %p191 = scmp.eq.s32.totalorder %s22, 1
      %p192 = por %p190, %p191
      %p193 = scmp.ne.s32.totalorder %s182, %s183
      %p194 = scmp.eq.s32.totalorder %s22, 0
      %p195 = por %p193, %p194
      %p196 = scmp.ne.s32.totalorder %s182, %s183
      %p197 = scmp.eq.s32.totalorder %s23, 1
      %p198 = por %p196, %p197
      %p200 = scmp.ne.s32.totalorder %s183, %s199
      %p201 = scmp.eq.s32.totalorder %s23, 0
      %p202 = por %p200, %p201
      %p203 = scmp.le.s32.totalorder 1, %s17
      %p204 = scmp.lt.s32.totalorder %s17, 3
      %p205 = pnand %p203, %p204
      %p206 = pneg %p205
      // Predicated region
      $region9: #{tpu_custom_call.1} parent=5 // pred_check
        _
      $region10: #{tpu_custom_call.1} parent=5 // pred_check_branch
        %208 = sbr.rel (%p205) target = $region12
      $region11: #{tpu_custom_call.1} parent=5 // pred_region
        %s209 = ssub.s32 %s17, 1
        // Predicated region
        $region13: #{tpu_custom_call.1} parent=11 // pred_check
          %p210 = pneg %p64
        $region14: #{tpu_custom_call.1} parent=11 // pred_check_branch
          %212 = sbr.rel (%p210) target = $region16
        $region15: #{tpu_custom_call.1} parent=11 // pred_region
          _
        $region16: #{tpu_custom_call.1} parent=11 // pred_fallthru
          _
        // Predicated region
        $region17: #{tpu_custom_call.1} parent=11 // pred_check
          %p213 = pneg %p85
        $region18: #{tpu_custom_call.1} parent=11 // pred_check_branch
          %215 = sbr.rel (%p213) target = $region20
        $region19: #{tpu_custom_call.1} parent=11 // pred_region
          _
        $region20: #{tpu_custom_call.1} parent=11 // pred_fallthru
          _
        // Predicated region
        $region21: #{tpu_custom_call.1} parent=11 // pred_check
          %p216 = pneg %p106
        $region22: #{tpu_custom_call.1} parent=11 // pred_check_branch
          %218 = sbr.rel (%p216) target = $region24
        $region23: #{tpu_custom_call.1} parent=11 // pred_region
          _
        $region24: #{tpu_custom_call.1} parent=11 // pred_fallthru
          _
        // Predicated region
        $region25: #{tpu_custom_call.1} parent=11 // pred_check
          %p219 = pneg %p127
        $region26: #{tpu_custom_call.1} parent=11 // pred_check_branch
          %221 = sbr.rel (%p219) target = $region28
        $region27: #{tpu_custom_call.1} parent=11 // pred_region
          _
        $region28: #{tpu_custom_call.1} parent=11 // pred_fallthru
          _
        // Predicated region
        $region29: #{tpu_custom_call.1} parent=11 // pred_check
          %p222 = pneg %p148
        $region30: #{tpu_custom_call.1} parent=11 // pred_check_branch
          %224 = sbr.rel (%p222) target = $region32
        $region31: #{tpu_custom_call.1} parent=11 // pred_region
          _
        $region32: #{tpu_custom_call.1} parent=11 // pred_fallthru
          _
        // Predicated region
        $region33: #{tpu_custom_call.1} parent=11 // pred_check
          %p225 = pneg %p169
        $region34: #{tpu_custom_call.1} parent=11 // pred_check_branch
          %227 = sbr.rel (%p225) target = $region36
        $region35: #{tpu_custom_call.1} parent=11 // pred_region
          _
        $region36: #{tpu_custom_call.1} parent=11 // pred_fallthru
          _
      $region12: #{tpu_custom_call.1} parent=5 // pred_fallthru
        _
      %p228 = scmp.lt.s32.totalorder %s17, 2
      // Predicated region
      $region37: #{tpu_custom_call.1} parent=5 // pred_check
        %p229 = pneg %p228
      $region38: #{tpu_custom_call.1} parent=5 // pred_check_branch
        %231 = sbr.rel (%p229) target = $region40
      $region39: #{tpu_custom_call.1} parent=5 // pred_region
        // Predicated region
        $region41: #{tpu_custom_call.1} parent=39 // pred_check
          %p232 = pneg %p37
        $region42: #{tpu_custom_call.1} parent=39 // pred_check_branch
          %234 = sbr.rel (%p232) target = $region44
        $region43: #{tpu_custom_call.1} parent=39 // pred_region
          %s235 = sand.u32 %s27, 1
          %s236 = sand.u32 %s27, 1
          %s237 = smul.addr %s236, 16
          %s238 = scalar_lea.vmem [#allocation3], %s237
          %s239 = smul.addr %s17, 8
          %s240 = scalar_lea.vmem %s0, %s239
          // Predicated region
          $region45: #{tpu_custom_call.1} parent=43 // pred_check
            _
          $region46: #{tpu_custom_call.1} parent=43 // pred_check_branch
            %242 = sbr.rel (0) target = $region48
          $region47: #{tpu_custom_call.1} parent=43 // pred_region
            // Predicated region
            $region49: #{tpu_custom_call.1} parent=47 // pred_check
              _
            $region50: #{tpu_custom_call.1} parent=47 // pred_check_branch
              %244 = sbr.rel (0) target = $region52
            $region51: #{tpu_custom_call.1} parent=47 // pred_region
              // Predicated region
              $region64: #{tpu_custom_call.1} parent=51 // pred_check
                _
              $region65: #{tpu_custom_call.1} parent=51 // pred_check_branch
                %262 = sbr.rel (0) target = $region67
              $region66: #{tpu_custom_call.1} parent=51 // pred_region
                loop: start=0, step=1, limit=1
                $region68: #{tpu_custom_call.1} parent=66 // loop_pre_header
                  _
                $region69: #{tpu_custom_call.1} parent=66 // loop_header
                  %s264 = sphi 0, %s268
                  %p265 = scmp.ge.s32.totalorder %s264, 1
                  %s269 = sphi %s240, %s240
                  %s270 = sphi %s238, %s238
                $region70: #{tpu_custom_call.1} parent=66 // loop_header_branch
                  %267 = sbr.rel (%p265) target = $region74
                $region71: #{tpu_custom_call.1} parent=66 // loop_body
                  %v271 = vld [vmem:[%s269] sm:$0xff]
                  %272 = vst [vmem:[%s270] sm:$0xff] %v271
                  %v273 = vld [vmem:[%s269 + $0x10] sm:$0xff]
                  %274 = vst [vmem:[%s270 + $0x8] sm:$0xff] %v273
                $region72: #{tpu_custom_call.1} parent=66 // loop_footer
                  %s268 = sadd.s32 1, %s264
                $region73: #{tpu_custom_call.1} parent=66 // loop_footer_branch
                  %263 = sbr.rel target = $region69
                $region74: #{tpu_custom_call.1} parent=66 // loop_exit
                  _
              $region67: #{tpu_custom_call.1} parent=51 // pred_fallthru
                _
              // Predicated region
              $region75: #{tpu_custom_call.1} parent=51 // pred_check
                _
              $region76: #{tpu_custom_call.1} parent=51 // pred_check_branch
                %276 = sbr.rel target = $region78
              $region77: #{tpu_custom_call.1} parent=51 // pred_region
                _
              $region78: #{tpu_custom_call.1} parent=51 // pred_fallthru
                _
            $region52: #{tpu_custom_call.1} parent=47 // pred_fallthru
              _
            // Predicated region
            $region53: #{tpu_custom_call.1} parent=47 // pred_check
              _
            $region54: #{tpu_custom_call.1} parent=47 // pred_check_branch
              %246 = sbr.rel target = $region56
            $region55: #{tpu_custom_call.1} parent=47 // pred_region
              %s248 = ssub.s32 256, 1
              loop: start=0, step=1, limit=1
              $region57: #{tpu_custom_call.1} parent=55 // loop_pre_header
                _
              $region58: #{tpu_custom_call.1} parent=55 // loop_header
                %s250 = sphi 0, %s254
                %p251 = scmp.ge.s32.totalorder %s250, 1
                %s255 = sphi %s240, %s240
                %s256 = sphi %s238, %s238
              $region59: #{tpu_custom_call.1} parent=55 // loop_header_branch
                %253 = sbr.rel (%p251) target = $region63
              $region60: #{tpu_custom_call.1} parent=55 // loop_body
                %v257 = vld [vmem:[%s255] sm:%s248]
                %258 = vst [vmem:[%s256] sm:%s248] %v257
                %v259 = vld [vmem:[%s255 + $0x10] sm:%s248]
                %260 = vst [vmem:[%s256 + $0x8] sm:%s248] %v259
              $region61: #{tpu_custom_call.1} parent=55 // loop_footer
                %s254 = sadd.s32 1, %s250
              $region62: #{tpu_custom_call.1} parent=55 // loop_footer_branch
                %249 = sbr.rel target = $region58
              $region63: #{tpu_custom_call.1} parent=55 // loop_exit
                _
            $region56: #{tpu_custom_call.1} parent=47 // pred_fallthru
              _
          $region48: #{tpu_custom_call.1} parent=43 // pred_fallthru
            _
          %277 = vnop
        $region44: #{tpu_custom_call.1} parent=39 // pred_fallthru
          _
      $region40: #{tpu_custom_call.1} parent=5 // pred_fallthru
        _
      %p278 = scmp.le.s32.totalorder 1, %s17
      %p279 = scmp.lt.s32.totalorder %s17, 3
      %p280 = pnand %p278, %p279
      %p281 = pneg %p280
      // Predicated region
      $region79: #{tpu_custom_call.1} parent=5 // pred_check
        _
      $region80: #{tpu_custom_call.1} parent=5 // pred_check_branch
        %283 = sbr.rel (%p280) target = $region82
      $region81: #{tpu_custom_call.1} parent=5 // pred_region
        %s284 = ssub.s32 %s17, 1
        %s285 = sand.u32 %s30, 1
        %s286 = sand.u32 %s30, 1
        %s287 = smul.addr %s286, 16
        %s288 = scalar_lea.vmem [#allocation3], %s287
        // Predicated region
        $region83: #{tpu_custom_call.1} parent=81 // pred_check
          %p289 = pneg %p43
        $region84: #{tpu_custom_call.1} parent=81 // pred_check_branch
          %291 = sbr.rel (%p289) target = $region86
        $region85: #{tpu_custom_call.1} parent=81 // pred_region
          _
        $region86: #{tpu_custom_call.1} parent=81 // pred_fallthru
          _
        %s292 = sand.u32 %s30, 1
        %s293 = sand.u32 %s30, 1
        %s294 = smul.addr %s293, 16
        %s295 = scalar_lea.vmem [#allocation3], %s294
        %p296 = pneg %p43
        %p297 = pneg %p40
        %p298 = pneg %p64
        %p299 = pneg %p61
        %p300 = pneg %p85
        %p301 = pneg %p82
        %p302 = pneg %p106
        %p303 = pneg %p103
        %p304 = pneg %p127
        %p305 = pneg %p124
        %p306 = pneg %p148
        %p307 = pneg %p145
        %p308 = pneg %p169
        %p309 = pneg %p166
        %p310 = pneg %p195
        %p311 = pneg %p192
        %s312 = sand.u32 %s182, 1
        %s313 = scalar_lea.sflag [#allocation5], %s312
        %s314 = sand.u32 %s182, 1
        %s315 = scalar_lea.vmem [#allocation4], %s314
        %v316 = vld [vmem:[%s288] sm:$0xff]
        %v317 = vld [vmem:[%s288 + $0x8] sm:$0xff]
        %v318 = vld [vmem:[%s1] sm:$0xff]
        %v319 = vld [vmem:[%s1 + $0x8] sm:$0xff]
        %v320 = vld [vmem:[%s1 + $0x10] sm:$0xff]
        %v321 = vld [vmem:[%s1 + $0x18] sm:$0xff]
        %v322 = vld [vmem:[%s1 + $0x20] sm:$0xff]
        %v323 = vld [vmem:[%s1 + $0x28] sm:$0xff]
        %v324 = vld [vmem:[%s2] sm:$0xff]
        %v325 = vld [vmem:[%s2 + $0x8] sm:$0xff]
        %v326 = vld [vmem:[%s2 + $0x10] sm:$0xff]
        %v327 = vld [vmem:[%s2 + $0x18] sm:$0xff]
        %v328 = vld [vmem:[%s2 + $0x20] sm:$0xff]
        %v329 = vld [vmem:[%s2 + $0x28] sm:$0xff]
        %331 = vset.pattern.permute.xlu0 0
        %332 = vperm.xlu0 %331, %v324
        %v333 = vpop.permute.xlu0 %332
        %336 = vset.pattern.permute.xlu0 0
        %337 = vperm.xlu0 %336, %v325
        %v338 = vpop.permute.xlu0 %337
        %341 = vset.pattern.permute.xlu0 0
        %342 = vperm.xlu0 %341, %v326
        %v343 = vpop.permute.xlu0 %342
        %346 = vset.pattern.permute.xlu0 0
        %347 = vperm.xlu0 %346, %v327
        %v348 = vpop.permute.xlu0 %347
        %351 = vset.pattern.permute.xlu0 0
        %352 = vperm.xlu0 %351, %v328
        %v353 = vpop.permute.xlu0 %352
        %356 = vset.pattern.permute.xlu0 0
        %357 = vperm.xlu0 %356, %v329
        %v358 = vpop.permute.xlu0 %357
        %vm360 = vcmask 130048
        %v362 = vsel %vm360, %v318, 0
        %v365 = vsel %vm360, %v319, 0
        %v368 = vsel %vm360, %v320, 0
        %v371 = vsel %vm360, %v321, 0
        %v374 = vsel %vm360, %v322, 0
        %v377 = vsel %vm360, %v323, 0
        %379 = vmatprep.subr.mxu0 0.0
        %380 = vmatpush1.msra.mxu0 0.0
        %381 = vmatprep.subr.mxu0 0.0
        %382 = vmatpush1.msra.mxu0 0.0
        %383 = vmatprep.subr.mxu0 0.0
        %384 = vmatpush1.msra.mxu0 0.0
        %385 = vmatprep.subr.mxu0 0.0
        %386 = vmatpush1.msra.mxu0 0.0
        %387 = vmatprep.subr.mxu0 0.0
        %388 = vmatpush1.msra.mxu0 0.0
        %389 = vmatprep.subr.mxu0 0.0
        %390 = vmatpush1.msra.mxu0 0.0
        %391 = vmatprep.subr.mxu0 0.0
        %392 = vmatpush1.msra.mxu0 0.0
        %393 = vmatprep.subr.mxu0 0.0
        %394 = vmatpush1.msra.mxu0 0.0
        %395 = vmatprep.subr.mxu0 0.0
        %396 = vmatpush1.msra.mxu0 0.0
        %397 = vmatprep.subr.mxu0 0.0
        %398 = vmatpush1.msra.mxu0 0.0
        %399 = vmatprep.subr.mxu0 0.0
        %400 = vmatpush1.msra.mxu0 0.0
        %401 = vmatprep.subr.mxu0 0.0
        %402 = vmatpush1.msra.mxu0 0.0
        %403 = vmatprep.subr.mxu0 0.0
        %404 = vmatpush1.msra.mxu0 0.0
        %405 = vmatprep.subr.mxu0 0.0
        %406 = vmatpush1.msra.mxu0 0.0
        %407 = vmatprep.subr.mxu0 0.0
        %408 = vmatpush1.msra.mxu0 %v317
        %409 = vmatprep.subr.mxu0 0.0
        %410 = vmatpush1.msra.mxu0 %v316
        %411 = vmatprep.subr.mxu0 0.0
        %412 = vmatpush2.msra.mxu0 0.0
        %413 = vmatprep.subr.mxu0 0.0
        %414 = vmatpush2.msra.mxu0 0.0
        %415 = vmatprep.subr.mxu0 0.0
        %416 = vmatpush2.msra.mxu0 0.0
        %417 = vmatprep.subr.mxu0 0.0
        %418 = vmatpush2.msra.mxu0 0.0
        %419 = vmatprep.subr.mxu0 0.0
        %420 = vmatpush2.msra.mxu0 0.0
        %421 = vmatprep.subr.mxu0 0.0
        %422 = vmatpush2.msra.mxu0 0.0
        %423 = vmatprep.subr.mxu0 0.0
        %424 = vmatpush2.msra.mxu0 0.0
        %425 = vmatprep.subr.mxu0 0.0
        %426 = vmatpush2.msra.mxu0 0.0
        %427 = vmatprep.subr.mxu0 0.0
        %428 = vmatpush2.msra.mxu0 0.0
        %429 = vmatprep.subr.mxu0 0.0
        %430 = vmatpush2.msra.mxu0 0.0
        %431 = vmatprep.subr.mxu0 0.0
        %432 = vmatpush2.msra.mxu0 0.0
        %433 = vmatprep.subr.mxu0 0.0
        %434 = vmatpush2.msra.mxu0 0.0
        %435 = vmatprep.subr.mxu0 0.0
        %436 = vmatpush2.msra.mxu0 0.0
        %437 = vmatprep.subr.mxu0 0.0
        %438 = vmatpush2.msra.mxu0 0.0
        %439 = vmatprep.subr.mxu0 0.0
        %440 = vmatpush2.msra.mxu0 0.0
        %441 = vmatprep.subr.mxu0 0.0
        %442 = vmatpush2.msra.mxu0 0.0
        %443 = vmatprep.mubr.f32.mxu0 0.0
        %444 = vmatmul.mubr.f32.gmra.mxu0 %v362
        %v445 = vpop.f32.mrf.mxu0
        %v446 = vadd.f32 %v333, %v445
        %v447 = vpop.f32.mrf.mxu0
        %448 = vmatprep.mubr.f32.mxu0 0.0
        %449 = vmatmul.mubr.f32.gmra.mxu0 %v365
        %v450 = vpop.f32.mrf.mxu0
        %v451 = vadd.f32 %v338, %v450
        %v452 = vpop.f32.mrf.mxu0
        %453 = vmatprep.mubr.f32.mxu0 0.0
        %454 = vmatmul.mubr.f32.gmra.mxu0 %v368
        %v455 = vpop.f32.mrf.mxu0
        %v456 = vadd.f32 %v343, %v455
        %v457 = vpop.f32.mrf.mxu0
        %458 = vmatprep.mubr.f32.mxu0 0.0
        %459 = vmatmul.mubr.f32.gmra.mxu0 %v371
        %v460 = vpop.f32.mrf.mxu0
        %v461 = vadd.f32 %v348, %v460
        %v462 = vpop.f32.mrf.mxu0
        %463 = vmatprep.mubr.f32.mxu0 0.0
        %464 = vmatmul.mubr.f32.gmra.mxu0 %v374
        %v465 = vpop.f32.mrf.mxu0
        %v466 = vadd.f32 %v353, %v465
        %v467 = vpop.f32.mrf.mxu0
        %468 = vmatprep.mubr.f32.mxu0 0.0
        %469 = vmatmul.mubr.f32.gmra.mxu0 %v377
        %v470 = vpop.f32.mrf.mxu0
        %v471 = vadd.f32 %v358, %v470
        %v472 = vpop.f32.mrf.mxu0
        %473 = vdwg.mxu0
        %v474 = vmax.f32 %v446, 0.0
        %v475 = vmax.f32 %v451, 0.0
        %v476 = vmax.f32 %v456, 0.0
        %v477 = vmax.f32 %v461, 0.0
        %v478 = vmax.f32 %v466, 0.0
        %v479 = vmax.f32 %v471, 0.0
        %v480 = vtanh.pop %v446
        %v481 = vtanh.pop %v451
        %v482 = vtanh.pop %v456
        %v483 = vtanh.pop %v461
        %v484 = vtanh.pop %v466
        %v485 = vtanh.pop %v471
        %v486 = vadd.f32 %v474, %v480
        %v487 = vadd.f32 %v475, %v481
        %v488 = vadd.f32 %v476, %v482
        %v489 = vadd.f32 %v477, %v483
        %v490 = vadd.f32 %v478, %v484
        %v491 = vadd.f32 %v479, %v485
        %v492 = vld [vmem:[%s3] sm:$0xff]
        %v493 = vld [vmem:[%s3 + $0x8] sm:$0xff]
        %v494 = vld [vmem:[%s3 + $0x10] sm:$0xff]
        %v495 = vld [vmem:[%s3 + $0x18] sm:$0xff]
        %v496 = vld [vmem:[%s3 + $0x20] sm:$0xff]
        %v497 = vld [vmem:[%s3 + $0x28] sm:$0xff]
        %v498 = vld [vmem:[%s4] sm:$0xff]
        %v499 = vld [vmem:[%s4 + $0x8] sm:$0xff]
        %v500 = vld [vmem:[%s4 + $0x10] sm:$0xff]
        %v501 = vld [vmem:[%s4 + $0x18] sm:$0xff]
        %v502 = vld [vmem:[%s4 + $0x20] sm:$0xff]
        %v503 = vld [vmem:[%s4 + $0x28] sm:$0xff]
        %505 = vset.pattern.permute.xlu0 0
        %506 = vperm.xlu0 %505, %v498
        %v507 = vpop.permute.xlu0 %506
        %510 = vset.pattern.permute.xlu0 0
        %511 = vperm.xlu0 %510, %v499
        %v512 = vpop.permute.xlu0 %511
        %515 = vset.pattern.permute.xlu0 0
        %516 = vperm.xlu0 %515, %v500
        %v517 = vpop.permute.xlu0 %516
        %520 = vset.pattern.permute.xlu0 0
        %521 = vperm.xlu0 %520, %v501
        %v522 = vpop.permute.xlu0 %521
        %525 = vset.pattern.permute.xlu0 0
        %526 = vperm.xlu0 %525, %v502
        %v527 = vpop.permute.xlu0 %526
        %530 = vset.pattern.permute.xlu0 0
        %531 = vperm.xlu0 %530, %v503
        %v532 = vpop.permute.xlu0 %531
        %vm534 = vcmask 392192
        %v536 = vsel %vm534, %v492, 0
        %v539 = vsel %vm534, %v493, 0
        %v542 = vsel %vm534, %v494, 0
        %v545 = vsel %vm534, %v495, 0
        %v548 = vsel %vm534, %v496, 0
        %v551 = vsel %vm534, %v497, 0
        %553 = vmatprep.subr.mxu0 0.0
        %554 = vmatpush1.msra.mxu0 0.0
        %555 = vmatprep.subr.mxu0 0.0
        %556 = vmatpush1.msra.mxu0 0.0
        %557 = vmatprep.subr.mxu0 0.0
        %558 = vmatpush1.msra.mxu0 0.0
        %559 = vmatprep.subr.mxu0 0.0
        %560 = vmatpush1.msra.mxu0 0.0
        %561 = vmatprep.subr.mxu0 0.0
        %562 = vmatpush1.msra.mxu0 0.0
        %563 = vmatprep.subr.mxu0 0.0
        %564 = vmatpush1.msra.mxu0 0.0
        %565 = vmatprep.subr.mxu0 0.0
        %566 = vmatpush1.msra.mxu0 0.0
        %567 = vmatprep.subr.mxu0 0.0
        %568 = vmatpush1.msra.mxu0 0.0
        %569 = vmatprep.subr.mxu0 0.0
        %570 = vmatpush1.msra.mxu0 0.0
        %571 = vmatprep.subr.mxu0 0.0
        %572 = vmatpush1.msra.mxu0 0.0
        %573 = vmatprep.subr.mxu0 0.0
        %574 = vmatpush1.msra.mxu0 %v491
        %575 = vmatprep.subr.mxu0 0.0
        %576 = vmatpush1.msra.mxu0 %v490
        %577 = vmatprep.subr.mxu0 0.0
        %578 = vmatpush1.msra.mxu0 %v489
        %579 = vmatprep.subr.mxu0 0.0
        %580 = vmatpush1.msra.mxu0 %v488
        %581 = vmatprep.subr.mxu0 0.0
        %582 = vmatpush1.msra.mxu0 %v487
        %583 = vmatprep.subr.mxu0 0.0
        %584 = vmatpush1.msra.mxu0 %v486
        %585 = vmatprep.subr.mxu0 0.0
        %586 = vmatpush2.msra.mxu0 0.0
        %587 = vmatprep.subr.mxu0 0.0
        %588 = vmatpush2.msra.mxu0 0.0
        %589 = vmatprep.subr.mxu0 0.0
        %590 = vmatpush2.msra.mxu0 0.0
        %591 = vmatprep.subr.mxu0 0.0
        %592 = vmatpush2.msra.mxu0 0.0
        %593 = vmatprep.subr.mxu0 0.0
        %594 = vmatpush2.msra.mxu0 0.0
        %595 = vmatprep.subr.mxu0 0.0
        %596 = vmatpush2.msra.mxu0 0.0
        %597 = vmatprep.subr.mxu0 0.0
        %598 = vmatpush2.msra.mxu0 0.0
        %599 = vmatprep.subr.mxu0 0.0
        %600 = vmatpush2.msra.mxu0 0.0
        %601 = vmatprep.subr.mxu0 0.0
        %602 = vmatpush2.msra.mxu0 0.0
        %603 = vmatprep.subr.mxu0 0.0
        %604 = vmatpush2.msra.mxu0 0.0
        %605 = vmatprep.subr.mxu0 0.0
        %606 = vmatpush2.msra.mxu0 0.0
        %607 = vmatprep.subr.mxu0 0.0
        %608 = vmatpush2.msra.mxu0 0.0
        %609 = vmatprep.subr.mxu0 0.0
        %610 = vmatpush2.msra.mxu0 0.0
        %611 = vmatprep.subr.mxu0 0.0
        %612 = vmatpush2.msra.mxu0 0.0
        %613 = vmatprep.subr.mxu0 0.0
        %614 = vmatpush2.msra.mxu0 0.0
        %615 = vmatprep.subr.mxu0 0.0
        %616 = vmatpush2.msra.mxu0 0.0
        %617 = vmatprep.mubr.f32.mxu0 0.0
        %618 = vmatmul.mubr.f32.gmra.mxu0 %v536
        %v619 = vpop.f32.mrf.mxu0
        %v620 = vadd.f32 %v507, %v619
        %v621 = vpop.f32.mrf.mxu0
        %622 = vmatprep.mubr.f32.mxu0 0.0
        %623 = vmatmul.mubr.f32.gmra.mxu0 %v539
        %v624 = vpop.f32.mrf.mxu0
        %v625 = vadd.f32 %v512, %v624
        %v626 = vpop.f32.mrf.mxu0
        %627 = vmatprep.mubr.f32.mxu0 0.0
        %628 = vmatmul.mubr.f32.gmra.mxu0 %v542
        %v629 = vpop.f32.mrf.mxu0
        %v630 = vadd.f32 %v517, %v629
        %v631 = vpop.f32.mrf.mxu0
        %632 = vmatprep.mubr.f32.mxu0 0.0
        %633 = vmatmul.mubr.f32.gmra.mxu0 %v545
        %v634 = vpop.f32.mrf.mxu0
        %v635 = vadd.f32 %v522, %v634
        %v636 = vpop.f32.mrf.mxu0
        %637 = vmatprep.mubr.f32.mxu0 0.0
        %638 = vmatmul.mubr.f32.gmra.mxu0 %v548
        %v639 = vpop.f32.mrf.mxu0
        %v640 = vadd.f32 %v527, %v639
        %v641 = vpop.f32.mrf.mxu0
        %642 = vmatprep.mubr.f32.mxu0 0.0
        %643 = vmatmul.mubr.f32.gmra.mxu0 %v551
        %v644 = vpop.f32.mrf.mxu0
        %v645 = vadd.f32 %v532, %v644
        %v646 = vpop.f32.mrf.mxu0
        %647 = vdwg.mxu0
        %v648 = vmax.f32 %v620, 0.0
        %v649 = vmax.f32 %v625, 0.0
        %v650 = vmax.f32 %v630, 0.0
        %v651 = vmax.f32 %v635, 0.0
        %v652 = vmax.f32 %v640, 0.0
        %v653 = vmax.f32 %v645, 0.0
        %v654 = vld [vmem:[%s5] sm:$0x1]
        %s655 = sld [smem:[#allocation2]]
        %v656 = vstv %s655
        %v658 = vsel %vm534, %v654, 0
        %660 = vmatprep.subr.mxu0 0.0
        %661 = vmatpush1.msra.mxu0 0.0
        %662 = vmatprep.subr.mxu0 0.0
        %663 = vmatpush1.msra.mxu0 0.0
        %664 = vmatprep.subr.mxu0 0.0
        %665 = vmatpush1.msra.mxu0 0.0
        %666 = vmatprep.subr.mxu0 0.0
        %667 = vmatpush1.msra.mxu0 0.0
        %668 = vmatprep.subr.mxu0 0.0
        %669 = vmatpush1.msra.mxu0 0.0
        %670 = vmatprep.subr.mxu0 0.0
        %671 = vmatpush1.msra.mxu0 0.0
        %672 = vmatprep.subr.mxu0 0.0
        %673 = vmatpush1.msra.mxu0 0.0
        %674 = vmatprep.subr.mxu0 0.0
        %675 = vmatpush1.msra.mxu0 0.0
        %676 = vmatprep.subr.mxu0 0.0
        %677 = vmatpush1.msra.mxu0 0.0
        %678 = vmatprep.subr.mxu0 0.0
        %679 = vmatpush1.msra.mxu0 0.0
        %680 = vmatprep.subr.mxu0 0.0
        %681 = vmatpush1.msra.mxu0 %v653
        %682 = vmatprep.subr.mxu0 0.0
        %683 = vmatpush1.msra.mxu0 %v652
        %684 = vmatprep.subr.mxu0 0.0
        %685 = vmatpush1.msra.mxu0 %v651
        %686 = vmatprep.subr.mxu0 0.0
        %687 = vmatpush1.msra.mxu0 %v650
        %688 = vmatprep.subr.mxu0 0.0
        %689 = vmatpush1.msra.mxu0 %v649
        %690 = vmatprep.subr.mxu0 0.0
        %691 = vmatpush1.msra.mxu0 %v648
        %692 = vmatprep.subr.mxu0 0.0
        %693 = vmatpush2.msra.mxu0 0.0
        %694 = vmatprep.subr.mxu0 0.0
        %695 = vmatpush2.msra.mxu0 0.0
        %696 = vmatprep.subr.mxu0 0.0
        %697 = vmatpush2.msra.mxu0 0.0
        %698 = vmatprep.subr.mxu0 0.0
        %699 = vmatpush2.msra.mxu0 0.0
        %700 = vmatprep.subr.mxu0 0.0
        %701 = vmatpush2.msra.mxu0 0.0
        %702 = vmatprep.subr.mxu0 0.0
        %703 = vmatpush2.msra.mxu0 0.0
        %704 = vmatprep.subr.mxu0 0.0
        %705 = vmatpush2.msra.mxu0 0.0
        %706 = vmatprep.subr.mxu0 0.0
        %707 = vmatpush2.msra.mxu0 0.0
        %708 = vmatprep.subr.mxu0 0.0
        %709 = vmatpush2.msra.mxu0 0.0
        %710 = vmatprep.subr.mxu0 0.0
        %711 = vmatpush2.msra.mxu0 0.0
        %712 = vmatprep.subr.mxu0 0.0
        %713 = vmatpush2.msra.mxu0 0.0
        %714 = vmatprep.subr.mxu0 0.0
        %715 = vmatpush2.msra.mxu0 0.0
        %716 = vmatprep.subr.mxu0 0.0
        %717 = vmatpush2.msra.mxu0 0.0
        %718 = vmatprep.subr.mxu0 0.0
        %719 = vmatpush2.msra.mxu0 0.0
        %720 = vmatprep.subr.mxu0 0.0
        %721 = vmatpush2.msra.mxu0 0.0
        %722 = vmatprep.subr.mxu0 0.0
        %723 = vmatpush2.msra.mxu0 0.0
        %724 = vmatprep.mubr.f32.mxu0 0.0
        %725 = vmatmul.mubr.f32.gmra.mxu0 %v658
        %v726 = vpop.f32.mrf.mxu0
        %v727 = vadd.f32 %v656, %v726
        %v728 = vpop.f32.mrf.mxu0
        %729 = vdwg.mxu0
        %v730 = vxor.u32 %v727, 2147483648
        %v731 = vmul.f32 %v730, 1.442695
        %v732 = vpow.pop %v731
        %v733 = vadd.f32 %v732, 1.0
        %v734 = vrcp.pop %v733
        %v735 = vmul.f32 1.0, %v734
        %736 = vst [vmem:[%s315] sm:$0x1] %v735
        %s737 = sand.u32 %s182, 1
        %s738 = scalar_lea.sflag [#allocation5], %s737
        %s739 = sand.u32 %s182, 1
        %s740 = scalar_lea.vmem [#allocation4], %s739
        // Predicated region
        $region87: #{tpu_custom_call.1} parent=81 // pred_check
          %p741 = pneg %p192
        $region88: #{tpu_custom_call.1} parent=81 // pred_check_branch
          %743 = sbr.rel (%p741) target = $region90
        $region89: #{tpu_custom_call.1} parent=81 // pred_region
          %s745 = ssub.s32 16, 16
          %746 = vsyncadd %s738, %s745
          %s747 = smul.addr %s22, 16
          %s748 = scalar_lea.hbm %s7, %s747
          %s750 = sshll.u32 %s740, 4
          %s751 = int_to_ptr.vmem [resolvable:$true] %s750
          %753 = dma.vmem_to_hbm [thread:$0]  %s751, 16, %s748, %s738
        $region90: #{tpu_custom_call.1} parent=81 // pred_fallthru
          _
      $region82: #{tpu_custom_call.1} parent=5 // pred_fallthru
        _
      %p754 = scmp.le.s32.totalorder 2, %s17
      // Predicated region
      $region91: #{tpu_custom_call.1} parent=5 // pred_check
        %p755 = pneg %p754
      $region92: #{tpu_custom_call.1} parent=5 // pred_check_branch
        %757 = sbr.rel (%p755) target = $region94
      $region93: #{tpu_custom_call.1} parent=5 // pred_region
        %s758 = ssub.s32 %s17, 2
        // Predicated region
        $region95: #{tpu_custom_call.1} parent=93 // pred_check
          %p759 = pneg %p198
        $region96: #{tpu_custom_call.1} parent=93 // pred_check_branch
          %761 = sbr.rel (%p759) target = $region98
        $region97: #{tpu_custom_call.1} parent=93 // pred_region
          %s762 = sand.u32 %s183, 1
          %s763 = scalar_lea.sflag [#allocation5], %s762
          %s764 = sand.u32 %s183, 1
          %s765 = scalar_lea.vmem [#allocation4], %s764
          %766 = dma.done %s763, 16
        $region98: #{tpu_custom_call.1} parent=93 // pred_fallthru
          _
      $region94: #{tpu_custom_call.1} parent=5 // pred_fallthru
        _
    $region6: #{tpu_custom_call.1} parent=1 // loop_footer
      %s21 = sadd.s32 1, %s17
    $region7: #{tpu_custom_call.1} parent=1 // loop_footer_branch
      %16 = sbr.rel target = $region3
    $region8: #{tpu_custom_call.1} parent=1 // loop_exit
      _
    %767 = vsyncpa [#allocation5], 1
    %s768 = scalar_lea.sflag [#allocation5], 1
    %769 = vsyncpa %s768, 1

</llo_original>
